<compile_context>
chip_gen: v7x
topology: tpu7x:2x2x1
jax: 0.10.0
libtpu: 0.0.40
codegen_flags: <defaults>
</compile_context>

<pallas_src>
import jax
import jax.numpy as jnp
from jax.experimental import pallas as pl
from jax.experimental.pallas import tpu as pltpu

KH = 3        # conv kernel height (over sequence)
D = 300       # embedding dim == conv kernel width
C = 100       # conv output channels
CP = 128      # lane-padded channel count used inside the kernel
NCLS = 5      # number of classes


def _make_kernel(L: int, lpad: int, lout: int):
    """Build the per-block kernel. L = true seq len, lpad = ceil(L/16)*16,
    lout = valid conv output length (all static)."""
    p = lout // 2                      # MaxPool2d((2,1)) output length (floor mode)

    def kernel(x_ref, wconv_ref, bconv_ref, feat_ref, xs_ref):
        tb, _, d = x_ref.shape         # (TB, L, D) f32 block straight from HBM
        m = tb * lpad                  # rows fed to the MXU M dimension

        # --- in-kernel bf16 cast + time padding into a tile-aligned staging
        # buffer; lpad % 16 == 0 makes the flatten below relayout-free. -------
        xs_ref[:, :L, :] = x_ref[...].astype(jnp.bfloat16)
        if lpad > L:
            xs_ref[:, L:, :] = jnp.zeros((tb, lpad - L, d), jnp.bfloat16)
        xf = xs_ref[...].reshape(m, d)                         # (TB*Lp, D) bf16

        # --- Conv2d(1, C, (KH, D)) as ONE matmul with the KH taps stacked
        # along N: (TB*Lp, 300) @ (300, 3*128) -> f32. -----------------------
        y = jnp.dot(xf, wconv_ref[...], preferred_element_type=jnp.float32)

        # Align taps in time with XLU rolls; per-tap lane slices at multiples
        # of 128 are free.  Rolled/wrapped rows only ever land at per-batch
        # time indices >= lout, which are masked out below.
        acc = y[:, 0:CP]
        for k in range(1, KH):
            acc = acc + pltpu.roll(y[:, k * CP:(k + 1) * CP],
                                   shift=m - k, axis=0)        # row t <- row t+k

        # bias + ReLU (f32 on the VPU)
        acc = jnp.maximum(acc + bconv_ref[...], 0.0)           # (TB*Lp, CP)

        # --- MaxPool2d((2,1)) fused with AdaptiveAvgPool2d((1,1)):
        #   feat = (1/p) * sum_{i<p} max(conv[2i], conv[2i+1])
        # "next row" via one more XLU roll; pick even rows t <= 2p-2 with a
        # {keep,0} select; single 1/p scale on the final (TB, CP) features.
        pairmax = jnp.maximum(acc, pltpu.roll(acc, shift=m - 1, axis=0))
        pm3 = pairmax.reshape(tb, lpad, CP)                    # aligned (Lp%8==0)
        t = jax.lax.broadcasted_iota(jnp.int32, (lpad, 1), 0)
        keep = jnp.logical_and(t % 2 == 0, t <= 2 * p - 2)
        feat_ref[...] = (jnp.sum(jnp.where(keep, pm3, 0.0), axis=1)
                         * jnp.float32(1.0 / p))               # (TB, CP) lane-dense

    return kernel


def _vmem_limit_bytes() -> int:
    """Generation-aware VMEM budget (~half of physical VMEM):
    v5e/v6e (128 MiB) -> 64 MiB, v7x (64 MiB) -> 32 MiB."""
    try:
        phys = int(pltpu.get_tpu_info().vmem_capacity_bytes)
    except Exception:
        phys = 64 * 1024 * 1024        # conservative (v7x-sized) fallback
    return max(32 * 1024 * 1024, min(96 * 1024 * 1024, phys // 2))


def cls_forward(x, wconv, bconv, wfc, bfc):
    """x: (B, L, D) float (f32 or bf16). Returns (B, NCLS) float32 logits."""
    B, L, d = x.shape
    assert d == D
    if L < KH + 1:
        raise ValueError("ClsModel needs seq_len >= 4 (conv kh=3, then maxpool 2).")
    lout = L - (KH - 1)
    lpad = -(-L // 16) * 16            # bf16-tile-aligned time length (padded in-kernel)

    # --- batch-tile selection (VMEM-budget driven) ---------------------------
    vmem_limit = _vmem_limit_bytes()
    # Per-batch-row footprint: double-buffered x block + bf16 staging scratch
    # (lanes padded to 384) + f32 matmul output + ~3 f32 temporaries.
    bytes_per_row = (2 * L * D * x.dtype.itemsize
                     + lpad * (384 * 2 + 384 * 4 + 3 * CP * 4))
    tb = max(1, (vmem_limit // 2) // bytes_per_row)
    tb = min(tb, B)
    if B >= 2:
        tb = min(tb, -(-B // 2))       # nblk >= 2: keep both v7x TensorCores busy
    nblk = -(-B // tb)
    tb = -(-B // nblk)                 # rebalance to minimize the ragged remainder
    nblk = -(-B // tb)

    # --- parameter prep (tiny): pad C -> 128 lanes, stack taps along N -------
    wc = jnp.zeros((KH, D, CP), jnp.bfloat16).at[:, :, :C].set(
        wconv.astype(jnp.bfloat16))
    wc = jnp.transpose(wc, (1, 0, 2)).reshape(D, KH * CP)      # (300, 384)
    bc = jnp.zeros((1, CP), jnp.float32).at[:, :C].set(
        jnp.reshape(bconv, (1, C)).astype(jnp.float32))

    # TODO(synk): for very long sequences (a single (L,300) slab + its f32
    # temporaries exceeding the VMEM budget even at tb=1) add an "arbitrary"
    # grid axis over L-chunks with a carried running pooled-sum scratch.

    feat = pl.pallas_call(
        _make_kernel(L, lpad, lout),
        out_shape=jax.ShapeDtypeStruct((nblk, tb, CP), jnp.float32),
        grid_spec=pltpu.PrefetchScalarGridSpec(
            num_scalar_prefetch=0,
            grid=(nblk,),
            in_specs=[
                pl.BlockSpec((tb, L, D), lambda b: (b, 0, 0)),    # x read straight from HBM
                pl.BlockSpec((D, KH * CP), lambda b: (0, 0)),     # stacked conv weight (resident)
                pl.BlockSpec((1, CP), lambda b: (0, 0)),          # conv bias
            ],
            out_specs=pl.BlockSpec((None, tb, CP), lambda b: (b, 0, 0)),  # lane-dense feat
            scratch_shapes=[pltpu.VMEM((tb, lpad, D), jnp.bfloat16)],     # bf16 staging
        ),
        compiler_params=pltpu.CompilerParams(
            dimension_semantics=("parallel",),
            vmem_limit_bytes=vmem_limit,
        ),
    )(x, wc, bc)

    # Tiny FC (Linear(100, 5)) batched across B outside the kernel.
    feat = feat.reshape(nblk * tb, CP)[:B, :C]
    return feat @ wfc + jnp.reshape(bfc, (1, NCLS))


def reference(x, wconv, bconv, wfc, bfc):
    """Pure-JAX reference of the PyTorch forward (same bf16 input rounding as
    the kernel's MXU path, f32 math) for the correctness check."""
    xb = x.astype(jnp.bfloat16).astype(jnp.float32)
    wb = wconv.astype(jnp.bfloat16).astype(jnp.float32)
    B, L, _ = x.shape
    lout = L - (KH - 1)
    conv = sum(jnp.einsum('bld,dc->blc', xb[:, k:k + lout, :], wb[k])
               for k in range(KH)) + bconv.reshape(1, 1, C)
    conv = jnp.maximum(conv, 0.0)
    p = lout // 2
    pooled = jnp.maximum(conv[:, 0:2 * p:2, :], conv[:, 1:2 * p:2, :])
    feat = jnp.mean(pooled, axis=1)
    return feat @ wfc + bfc.reshape(1, NCLS)


if __name__ == "__main__":
    key = jax.random.PRNGKey(0)
    kx, kw1, kb1, kw2, kb2 = jax.random.split(key, 5)

    B, L = 2, 8                        # small demo shapes; D fixed at 300 by the module
    x = jax.random.normal(kx, (B, L, D), dtype=jnp.float32)

    # Deterministic synthetic parameters (shapes dictated by the module __init__)
    wconv = jax.random.normal(kw1, (KH, D, C), dtype=jnp.float32) * 0.05
    bconv = jax.random.normal(kb1, (1, C), dtype=jnp.float32) * 0.05
    wfc = jax.random.normal(kw2, (C, NCLS), dtype=jnp.float32) * 0.1
    bfc = jax.random.normal(kb2, (1, NCLS), dtype=jnp.float32) * 0.1

    out = jax.block_until_ready(cls_forward(x, wconv, bconv, wfc, bfc))
    ref = jax.block_until_ready(reference(x, wconv, bconv, wfc, bfc))

    assert out.shape == (B, NCLS)
    assert jnp.allclose(out, ref, atol=2e-2, rtol=2e-2), (out, ref)

    print("KERNEL_OK")
</pallas_src>

<mosaic_0001>
module attributes {stable_mosaic.version = 11 : i64} {
  func.func @kernel(%arg0: i32, %arg1: memref<1x8x300xf32, #tpu.memory_space<vmem>>, %arg2: memref<300x384xbf16, #tpu.memory_space<vmem>>, %arg3: memref<1x128xf32, #tpu.memory_space<vmem>>, %arg4: memref<1x1x128xf32, #tpu.memory_space<vmem>>, %arg5: memref<1x16x300xbf16, #tpu.memory_space<vmem>>) attributes {dimension_semantics = [#tpu.dimension_semantics<parallel>], iteration_bounds = array<i64: 2>, scalar_prefetch = 0 : i64, scratch_operands = 1 : i64, tpu.core_type = #tpu.core_type<tc>, window_params = [{transform_indices = @transform_0, window_bounds = array<i64: 1, 8, 300>}, {pipeline_mode = #tpu.pipeline_mode<synchronous>, transform_indices = @transform_1, window_bounds = array<i64: 300, 384>}, {pipeline_mode = #tpu.pipeline_mode<synchronous>, transform_indices = @transform_2, window_bounds = array<i64: 1, 128>}, {transform_indices = @transform_3, window_bounds = array<i64: 1, 1, 128>}]} {
    %c0 = arith.constant 0 : index
    %c0_0 = arith.constant 0 : index
    %c0_1 = arith.constant 0 : index
    %0 = vector.load %arg1[%c0, %c0_0, %c0_1] : memref<1x8x300xf32, #tpu.memory_space<vmem>>, vector<1x8x300xf32>
    %1 = arith.truncf %0 : vector<1x8x300xf32> to vector<1x8x300xbf16>
    %c0_2 = arith.constant 0 : index
    %c0_3 = arith.constant 0 : index
    %c0_4 = arith.constant 0 : index
    %2 = vector.load %arg5[%c0_2, %c0_3, %c0_4] : memref<1x16x300xbf16, #tpu.memory_space<vmem>>, vector<1x8x300xbf16>
    tpu.vector_store %arg5[%c0_2, %c0_3, %c0_4], %1 {strides = array<i32>} : memref<1x16x300xbf16, #tpu.memory_space<vmem>>, vector<1x8x300xbf16>,
    %cst = arith.constant 0.000000e+00 : bf16
    %3 = vector.broadcast %cst : bf16 to vector<1x8x300xbf16>
    %c0_5 = arith.constant 0 : index
    %c8 = arith.constant 8 : index
    %c0_6 = arith.constant 0 : index
    %4 = vector.load %arg5[%c0_5, %c8, %c0_6] : memref<1x16x300xbf16, #tpu.memory_space<vmem>>, vector<1x8x300xbf16>
    tpu.vector_store %arg5[%c0_5, %c8, %c0_6], %3 {strides = array<i32>} : memref<1x16x300xbf16, #tpu.memory_space<vmem>>, vector<1x8x300xbf16>,
    %c0_7 = arith.constant 0 : index
    %c0_8 = arith.constant 0 : index
    %c0_9 = arith.constant 0 : index
    %5 = vector.load %arg5[%c0_7, %c0_8, %c0_9] : memref<1x16x300xbf16, #tpu.memory_space<vmem>>, vector<1x16x300xbf16>
    %6 = vector.shape_cast %5 : vector<1x16x300xbf16> to vector<16x300xbf16>
    %c0_10 = arith.constant 0 : index
    %c0_11 = arith.constant 0 : index
    %7 = vector.load %arg2[%c0_10, %c0_11] : memref<300x384xbf16, #tpu.memory_space<vmem>>, vector<300x384xbf16>
    %cst_12 = arith.constant dense<0.000000e+00> : vector<16x384xf32>
    %8 = tpu.matmul %6, %7, %cst_12 {dimension_numbers = #tpu.dot_dimension_numbers<[1], [0], [0], [1], [0, 0, 1, 1], [], []>} : vector<16x300xbf16>, vector<300x384xbf16>, vector<16x384xf32> -> vector<16x384xf32>
    %9 = vector.extract_strided_slice %8 {offsets = [0, 0], sizes = [16, 128], strides = [1, 1]} : vector<16x384xf32> to vector<16x128xf32>
    %10 = vector.extract_strided_slice %8 {offsets = [0, 128], sizes = [16, 128], strides = [1, 1]} : vector<16x384xf32> to vector<16x128xf32>
    %c15_i32 = arith.constant 15 : i32
    %11 = tpu.dynamic_rotate %10 by %c15_i32 dim 0 : vector<16x128xf32>, i32 -> vector<16x128xf32>
    %12 = arith.addf %9, %11 : vector<16x128xf32>
    %13 = vector.extract_strided_slice %8 {offsets = [0, 256], sizes = [16, 128], strides = [1, 1]} : vector<16x384xf32> to vector<16x128xf32>
    %c14_i32 = arith.constant 14 : i32
    %14 = tpu.dynamic_rotate %13 by %c14_i32 dim 0 : vector<16x128xf32>, i32 -> vector<16x128xf32>
    %15 = arith.addf %12, %14 : vector<16x128xf32>
    %c0_13 = arith.constant 0 : index
    %c0_14 = arith.constant 0 : index
    %16 = vector.load %arg3[%c0_13, %c0_14] : memref<1x128xf32, #tpu.memory_space<vmem>>, vector<1x128xf32>
    %17 = vector.broadcast %16 : vector<1x128xf32> to vector<16x128xf32>
    %18 = arith.addf %15, %17 : vector<16x128xf32>
    %cst_15 = arith.constant 0.000000e+00 : f32
    %19 = vector.broadcast %cst_15 : f32 to vector<16x128xf32>
    %20 = arith.maximumf %18, %19 : vector<16x128xf32>
    %c15_i32_16 = arith.constant 15 : i32
    %21 = tpu.dynamic_rotate %20 by %c15_i32_16 dim 0 : vector<16x128xf32>, i32 -> vector<16x128xf32>
    %22 = arith.maximumf %20, %21 : vector<16x128xf32>
    %23 = vector.shape_cast %22 : vector<16x128xf32> to vector<1x16x128xf32>
    %24 = tpu.iota {dimensions = array<i32: 0>} : vector<16x1xi32>
    %c2_i32 = arith.constant 2 : i32
    %c0_i32 = arith.constant 0 : i32
    %25 = arith.cmpi eq, %c2_i32, %c0_i32 : i32
    %c1_i32 = arith.constant 1 : i32
    %26 = arith.select %25, %c1_i32, %c2_i32 : i32
    %27 = vector.broadcast %26 : i32 to vector<16x1xi32>
    %28 = arith.remsi %24, %27 : vector<16x1xi32>
    %c0_i32_17 = arith.constant 0 : i32
    %29 = vector.broadcast %c0_i32_17 : i32 to vector<16x1xi32>
    %30 = arith.cmpi ne, %28, %29 : vector<16x1xi32>
    %c0_i32_18 = arith.constant 0 : i32
    %31 = vector.broadcast %c0_i32_18 : i32 to vector<16x1xi32>
    %32 = arith.cmpi slt, %28, %31 : vector<16x1xi32>
    %c0_i32_19 = arith.constant 0 : i32
    %33 = arith.cmpi slt, %26, %c0_i32_19 : i32
    %34 = vector.broadcast %33 : i1 to vector<16x1xi1>
    %35 = vector.broadcast %34 : vector<16x1xi1> to vector<16x1xi1>
    %36 = arith.xori %32, %35 : vector<16x1xi1>
    %37 = arith.andi %36, %30 : vector<16x1xi1>
    %38 = vector.broadcast %26 : i32 to vector<16x1xi32>
    %39 = arith.addi %28, %38 : vector<16x1xi32>
    %40 = arith.select %37, %39, %28 : vector<16x1xi1>, vector<16x1xi32>
    %c0_i32_20 = arith.constant 0 : i32
    %41 = vector.broadcast %c0_i32_20 : i32 to vector<16x1xi32>
    %42 = arith.cmpi eq, %40, %41 : vector<16x1xi32>
    %c4_i32 = arith.constant 4 : i32
    %43 = vector.broadcast %c4_i32 : i32 to vector<16x1xi32>
    %44 = arith.cmpi sle, %24, %43 : vector<16x1xi32>
    %45 = arith.andi %42, %44 : vector<16x1xi1>
    %cst_21 = arith.constant 0.000000e+00 : f32
    %46 = vector.shape_cast %45 : vector<16x1xi1> to vector<1x16x1xi1>
    %47 = vector.broadcast %46 : vector<1x16x1xi1> to vector<1x16x128xi1>
    %48 = vector.broadcast %cst_21 : f32 to vector<1x16x128xf32>
    %49 = arith.select %47, %23, %48 : vector<1x16x128xi1>, vector<1x16x128xf32>
    %cst_22 = arith.constant dense<0.000000e+00> : vector<1x128xf32>
    %50 = vector.multi_reduction <add>, %49, %cst_22 [1] : vector<1x16x128xf32> to vector<1x128xf32>
    %cst_23 = arith.constant 0.333333343 : f32
    %51 = vector.broadcast %cst_23 : f32 to vector<1x128xf32>
    %52 = arith.mulf %50, %51 : vector<1x128xf32>
    %c0_24 = arith.constant 0 : index
    %c0_25 = arith.constant 0 : index
    %c0_26 = arith.constant 0 : index
    %53 = vector.load %arg4[%c0_24, %c0_25, %c0_26] : memref<1x1x128xf32, #tpu.memory_space<vmem>>, vector<1x1x128xf32>
    %54 = vector.shape_cast %53 : vector<1x1x128xf32> to vector<1x128xf32>
    %55 = vector.shape_cast %52 : vector<1x128xf32> to vector<1x1x128xf32>
    tpu.vector_store %arg4[%c0_24, %c0_25, %c0_26], %55 {strides = array<i32>} : memref<1x1x128xf32, #tpu.memory_space<vmem>>, vector<1x1x128xf32>,
    return
  }
  func.func @transform_0(%arg0: i32) -> (i32, i32, i32) {
    %c0_i32 = arith.constant 0 : i32
    %c0_i32_0 = arith.constant 0 : i32
    %c0_i32_1 = arith.constant 0 : i32
    return %arg0, %c0_i32, %c0_i32_0 : i32, i32, i32
  }
  func.func @transform_1(%arg0: i32) -> (i32, i32) {
    %c0_i32 = arith.constant 0 : i32
    %c0_i32_0 = arith.constant 0 : i32
    %c0_i32_1 = arith.constant 0 : i32
    return %c0_i32, %c0_i32_0 : i32, i32
  }
  func.func @transform_2(%arg0: i32) -> (i32, i32) {
    %c0_i32 = arith.constant 0 : i32
    %c0_i32_0 = arith.constant 0 : i32
    %c0_i32_1 = arith.constant 0 : i32
    return %c0_i32, %c0_i32_0 : i32, i32
  }
  func.func @transform_3(%arg0: i32) -> (i32, i32, i32) {
    %c0_i32 = arith.constant 0 : i32
    %c0_i32_0 = arith.constant 0 : i32
    %c0_i32_1 = arith.constant 0 : i32
    return %arg0, %c0_i32, %c0_i32_0 : i32, i32, i32
  }
}

</mosaic_0001>

<llo_original>
// kernel: tpu_custom_call.1
$region0: #{tpu_custom_call.1}
  #allocation0 [shape = 'u32[]', space=smem, size = 0x4, offset = 0x4, fixed_abs, tag = 'smem constant byte address 0x4 - core index']
  #allocation1 [shape = 'u32[144,128]{1,0:T(1,128)}', space=vmem, size = 0x12000, scoped, tag = 'internal scratch']
  #allocation2 [shape = 'bf16[1,16,300]{2,1,0:T(16,128)(2,1)}', space=vmem, size = 0x3000, scoped, tag = 'scratch operand']
  %s0 = inlined_call_operand.hbm [shape: f32[2,8,300], index: 0, kind: input, shape index: {}]
  %s1 = inlined_call_operand.hbm [shape: bf16[300,384], index: 1, kind: input, shape index: {}]
  %s2 = inlined_call_operand.vmem [shape: f32[1,128], index: 2, kind: input, shape index: {}]
  %s3 = inlined_call_operand.hbm [shape: f32[2,1,128], index: 3, kind: output, shape index: {}]
  %s4 = sld [smem:[#allocation0]]
  $region53: #{tpu_custom_call.1} parent=0
    _
  %s6 = ssub.s32 1, %s4
  %s7 = scalar_select 0, %s6, %s4
  $region1: #{tpu_custom_call.1} parent=0
    #allocation3 [shape = 'u8[24576]{0}', space=vmem, size = 0x6000, scoped, tag = 'input window, operand 0']
    #allocation4 [shape = 's32[2]{0}', space=sflag, size = 0x8, scoped, tag = 'scoped memory for tpu_custom_call.1']
    #allocation5 [shape = 's32[2]{0}', space=sflag, size = 0x8, scoped, tag = 'scoped memory for tpu_custom_call.1']
    #allocation6 [shape = 'u8[233472]{0}', space=vmem, size = 0x39000, scoped, tag = 'input window, operand 1, single buffered']
    #allocation7 [shape = 's32[1]{0}', space=sflag, size = 0x4, scoped, tag = 'scoped memory for tpu_custom_call.1']
    #allocation8 [shape = 'u8[1024]{0}', space=vmem, size = 0x400, scoped, tag = 'output window, operand 0']
    %8 = vsyncpa [#allocation4], 0
    %s9 = scalar_lea.sflag [#allocation4], 1
    %10 = vsyncpa %s9, 0
    %11 = vsyncpa [#allocation7], 0
    %12 = vsyncpa [#allocation5], 0
    %s13 = scalar_lea.sflag [#allocation5], 1
    %14 = vsyncpa %s13, 0
    loop: start=0, step=1, limit=4
    $region2: #{tpu_custom_call.1} parent=1 // loop_pre_header
      _
    $region3: #{tpu_custom_call.1} parent=1 // loop_header
      %s16 = sphi 0, %s20
      %p17 = scmp.ge.s32.totalorder %s16, 4
      %s26 = sphi 0, %s28
      %s29 = sphi 0, %s26
      %s30 = sphi 0, %s29
      %s46 = sphi 0, %s30
      %s50 = sphi 0, %s50
      %s52 = sphi 0, %s50
      %s53 = sphi 0, %s52
      %s67 = sphi 0, %s53
      %s71 = sphi 0, %s71
      %s73 = sphi 0, %s71
      %s74 = sphi 0, %s73
      %s88 = sphi 0, %s74
      %s94 = sphi 0, %s96
      %s97 = sphi 0, %s94
      %s98 = sphi 0, %s97
      %s114 = sphi 0, %s98
    $region4: #{tpu_custom_call.1} parent=1 // loop_header_branch
      %19 = sbr.rel (%p17) target = $region8
    $region5: #{tpu_custom_call.1} parent=1 // loop_body
      %s21 = ssub.s32 %s16, 1
      %s22 = ssub.s32 %s16, 2
      %s23 = sadd.s32 %s16, 1
      %s24 = ssub.s32 %s16, %s23
      %p25 = scmp.eq.s32.totalorder %s24, 0
      %s27 = sadd.s32 %s26, 1
      %s28 = scalar_select %p25, %s26, %s27
      %p31 = pneg %p25
      %p32 = scmp.eq.s32.totalorder %s16, 1
      %p33 = por %p31, %p32
      %p34 = scmp.ne.s32.totalorder %s26, %s29
      %p35 = scmp.eq.s32.totalorder %s16, 0
      %p36 = por %p34, %p35
      %p37 = scmp.ne.s32.totalorder %s26, %s29
      %p38 = scmp.eq.s32.totalorder %s21, 1
      %p39 = por %p37, %p38
      %p40 = scmp.ne.s32.totalorder %s29, %s30
      %p41 = scmp.eq.s32.totalorder %s21, 0
      %p42 = por %p40, %p41
      %p43 = scmp.ne.s32.totalorder %s29, %s30
      %p44 = scmp.eq.s32.totalorder %s22, 1
      %p45 = por %p43, %p44
      %p47 = scmp.ne.s32.totalorder %s30, %s46
      %p48 = scmp.eq.s32.totalorder %s22, 0
      %p49 = por %p47, %p48
      %s51 = sadd.s32 %s50, 1
      %p54 = scmp.eq.s32.totalorder %s16, 1
      %p55 = scmp.ne.s32.totalorder %s50, %s52
      %p56 = scmp.eq.s32.totalorder %s16, 0
      %p57 = por %p55, %p56
      %p58 = scmp.ne.s32.totalorder %s50, %s52
      %p59 = scmp.eq.s32.totalorder %s21, 1
      %p60 = por %p58, %p59
      %p61 = scmp.ne.s32.totalorder %s52, %s53
      %p62 = scmp.eq.s32.totalorder %s21, 0
      %p63 = por %p61, %p62
      %p64 = scmp.ne.s32.totalorder %s52, %s53
      %p65 = scmp.eq.s32.totalorder %s22, 1
      %p66 = por %p64, %p65
      %p68 = scmp.ne.s32.totalorder %s53, %s67
      %p69 = scmp.eq.s32.totalorder %s22, 0
      %p70 = por %p68, %p69
      %s72 = sadd.s32 %s71, 1
      %p75 = scmp.eq.s32.totalorder %s16, 1
      %p76 = scmp.ne.s32.totalorder %s71, %s73
      %p77 = scmp.eq.s32.totalorder %s16, 0
      %p78 = por %p76, %p77
      %p79 = scmp.ne.s32.totalorder %s71, %s73
      %p80 = scmp.eq.s32.totalorder %s21, 1
      %p81 = por %p79, %p80
      %p82 = scmp.ne.s32.totalorder %s73, %s74
      %p83 = scmp.eq.s32.totalorder %s21, 0
      %p84 = por %p82, %p83
      %p85 = scmp.ne.s32.totalorder %s73, %s74
      %p86 = scmp.eq.s32.totalorder %s22, 1
      %p87 = por %p85, %p86
      %p89 = scmp.ne.s32.totalorder %s74, %s88
      %p90 = scmp.eq.s32.totalorder %s22, 0
      %p91 = por %p89, %p90
      %s92 = ssub.s32 %s16, %s23
      %p93 = scmp.eq.s32.totalorder %s92, 0
      %s95 = sadd.s32 %s94, 1
      %s96 = scalar_select %p93, %s94, %s95
      %p99 = pneg %p93
      %p100 = scmp.eq.s32.totalorder %s16, 1
      %p101 = por %p99, %p100
      %p102 = scmp.ne.s32.totalorder %s94, %s97
      %p103 = scmp.eq.s32.totalorder %s16, 0
      %p104 = por %p102, %p103
      %p105 = scmp.ne.s32.totalorder %s94, %s97
      %p106 = scmp.eq.s32.totalorder %s21, 1
      %p107 = por %p105, %p106
      %p108 = scmp.ne.s32.totalorder %s97, %s98
      %p109 = scmp.eq.s32.totalorder %s21, 0
      %p110 = por %p108, %p109
      %p111 = scmp.ne.s32.totalorder %s97, %s98
      %p112 = scmp.eq.s32.totalorder %s22, 1
      %p113 = por %p111, %p112
      %p115 = scmp.ne.s32.totalorder %s98, %s114
      %p116 = scmp.eq.s32.totalorder %s22, 0
      %p117 = por %p115, %p116
      %p118 = scmp.le.s32.totalorder 1, %s16
      %p119 = scmp.lt.s32.totalorder %s16, 3
      %p120 = pnand %p118, %p119
      %p121 = pneg %p120
      // Predicated region
      $region9: #{tpu_custom_call.1} parent=5 // pred_check
        _
      $region10: #{tpu_custom_call.1} parent=5 // pred_check_branch
        %123 = sbr.rel (%p120) target = $region12
      $region11: #{tpu_custom_call.1} parent=5 // pred_region
        %s124 = ssub.s32 %s16, 1
        // Predicated region
        $region13: #{tpu_custom_call.1} parent=11 // pred_check
          %p125 = pneg %p63
        $region14: #{tpu_custom_call.1} parent=11 // pred_check_branch
          %127 = sbr.rel (%p125) target = $region16
        $region15: #{tpu_custom_call.1} parent=11 // pred_region
          %s129 = ssub.s32 7296, 7296
          %130 = vsyncadd [#allocation7], %s129
          %s131 = sshll.u32 [#allocation6], 4
          %s132 = int_to_ptr.vmem [resolvable:$true] %s131
          %137 = dma.hbm_to_vmem [thread:$0]  %s1, 7296, %s132, [#allocation7], 192, 192, 12
        $region16: #{tpu_custom_call.1} parent=11 // pred_fallthru
          _
        // Predicated region
        $region17: #{tpu_custom_call.1} parent=11 // pred_check
          %p138 = pneg %p84
        $region18: #{tpu_custom_call.1} parent=11 // pred_check_branch
          %140 = sbr.rel (%p138) target = $region20
        $region19: #{tpu_custom_call.1} parent=11 // pred_region
          _
        $region20: #{tpu_custom_call.1} parent=11 // pred_fallthru
          _
      $region12: #{tpu_custom_call.1} parent=5 // pred_fallthru
        _
      %p141 = scmp.lt.s32.totalorder %s16, 2
      // Predicated region
      $region21: #{tpu_custom_call.1} parent=5 // pred_check
        %p142 = pneg %p141
      $region22: #{tpu_custom_call.1} parent=5 // pred_check_branch
        %144 = sbr.rel (%p142) target = $region24
      $region23: #{tpu_custom_call.1} parent=5 // pred_region
        // Predicated region
        $region25: #{tpu_custom_call.1} parent=23 // pred_check
          %p145 = pneg %p36
        $region26: #{tpu_custom_call.1} parent=23 // pred_check_branch
          %147 = sbr.rel (%p145) target = $region28
        $region27: #{tpu_custom_call.1} parent=23 // pred_region
          %s148 = sand.u32 %s26, 1
          %s149 = scalar_lea.sflag [#allocation4], %s148
          %s150 = sand.u32 %s26, 1
          %s151 = smul.addr %s150, 24
          %s152 = scalar_lea.vmem [#allocation3], %s151
          %s154 = ssub.s32 384, 384
          %155 = vsyncadd %s149, %s154
          %s156 = smul.addr %s16, 3
          %s157 = smul.addr %s156, 128
          %s158 = scalar_lea.hbm %s0, %s157
          %s160 = sshll.u32 %s152, 4
          %s161 = int_to_ptr.vmem [resolvable:$true] %s160
          %163 = dma.hbm_to_vmem [thread:$0]  %s158, 384, %s161, %s149
        $region28: #{tpu_custom_call.1} parent=23 // pred_fallthru
          _
      $region24: #{tpu_custom_call.1} parent=5 // pred_fallthru
        _
      %p164 = scmp.le.s32.totalorder 1, %s16
      %p165 = scmp.lt.s32.totalorder %s16, 3
      %p166 = pnand %p164, %p165
      %p167 = pneg %p166
      // Predicated region
      $region29: #{tpu_custom_call.1} parent=5 // pred_check
        _
      $region30: #{tpu_custom_call.1} parent=5 // pred_check_branch
        %169 = sbr.rel (%p166) target = $region32
      $region31: #{tpu_custom_call.1} parent=5 // pred_region
        %s170 = ssub.s32 %s16, 1
        %s171 = sand.u32 %s29, 1
        %s172 = scalar_lea.sflag [#allocation4], %s171
        %s173 = sand.u32 %s29, 1
        %s174 = smul.addr %s173, 24
        %s175 = scalar_lea.vmem [#allocation3], %s174
        // Predicated region
        $region33: #{tpu_custom_call.1} parent=31 // pred_check
          %p176 = pneg %p42
        $region34: #{tpu_custom_call.1} parent=31 // pred_check_branch
          %178 = sbr.rel (%p176) target = $region36
        $region35: #{tpu_custom_call.1} parent=31 // pred_region
          %179 = dma.done %s172, 384
        $region36: #{tpu_custom_call.1} parent=31 // pred_fallthru
          _
        // Predicated region
        $region37: #{tpu_custom_call.1} parent=31 // pred_check
          %p180 = pneg %p63
        $region38: #{tpu_custom_call.1} parent=31 // pred_check_branch
          %182 = sbr.rel (%p180) target = $region40
        $region39: #{tpu_custom_call.1} parent=31 // pred_region
          %183 = dma.done [#allocation7], 7296
        $region40: #{tpu_custom_call.1} parent=31 // pred_fallthru
          _
        %s184 = sand.u32 %s29, 1
        %s185 = scalar_lea.sflag [#allocation4], %s184
        %s186 = sand.u32 %s29, 1
        %s187 = smul.addr %s186, 24
        %s188 = scalar_lea.vmem [#allocation3], %s187
        %p189 = pneg %p42
        %p190 = pneg %p39
        %p191 = pneg %p63
        %p192 = pneg %p60
        %p193 = pneg %p84
        %p194 = pneg %p81
        %p195 = pneg %p110
        %p196 = pneg %p107
        %s197 = sand.u32 %s97, 1
        %s198 = scalar_lea.sflag [#allocation5], %s197
        %s199 = sand.u32 %s97, 1
        %s200 = scalar_lea.vmem [#allocation8], %s199
        %v202 = vld [vmem:[%s175] sm:$0xff]
        %v203 = vld [vmem:[%s175 + $0x8] sm:$0xff]
        %v204 = vld [vmem:[%s175 + $0x10] sm:$0xff]
        %v205 = vpack.c.bf16 %v202, %v202
        %v206 = vpack.c.bf16 %v203, %v203
        %v207 = vpack.c.bf16 %v204, %v204
        %208 = vst [vmem:[#allocation2] sm:$0xf] %v205
        %209 = vst [vmem:[#allocation2 + $0x8] sm:$0xf] %v206
        %vm210 = vcmask 355328
        %211 = vst.msk [vmem:[#allocation2 + $0x10] sm:$0xf] %vm210, %v207
        %212 = vst [vmem:[#allocation2] sm:$0xf0] 0
        %213 = vst [vmem:[#allocation2 + $0x8] sm:$0xf0] 0
        %vm214 = vcmask 359428
        %215 = vst.msk [vmem:[#allocation2 + $0x10] sm:$0xf0] %vm214, 0
        %v216 = vld [vmem:[#allocation2] sm:$0xff]
        %v217 = vld [vmem:[#allocation2 + $0x8] sm:$0xff]
        %v218 = vld [vmem:[#allocation2 + $0x10] sm:$0xff]
        %v219 = vld [vmem:[#allocation6] sm:$0xff]
        %v220 = vld [vmem:[#allocation6 + $0x8] sm:$0xf]
        %v221 = vld [vmem:[#allocation6 + $0xc] sm:$0xff]
        %v222 = vld [vmem:[#allocation6 + $0x14] sm:$0xf]
        %v223 = vld [vmem:[#allocation6 + $0x18] sm:$0xff]
        %v224 = vld [vmem:[#allocation6 + $0x20] sm:$0xf]
        %v225 = vld [vmem:[#allocation6 + $0x24] sm:$0xff]
        %v226 = vld [vmem:[#allocation6 + $0x2c] sm:$0xf]
        %v227 = vld [vmem:[#allocation6 + $0x30] sm:$0xff]
        %v228 = vld [vmem:[#allocation6 + $0x38] sm:$0xf]
        %v229 = vld [vmem:[#allocation6 + $0x3c] sm:$0xff]
        %v230 = vld [vmem:[#allocation6 + $0x44] sm:$0xf]
        %v231 = vld [vmem:[#allocation6 + $0x48] sm:$0xff]
        %v232 = vld [vmem:[#allocation6 + $0x50] sm:$0xf]
        %v233 = vld [vmem:[#allocation6 + $0x54] sm:$0xff]
        %v234 = vld [vmem:[#allocation6 + $0x5c] sm:$0xf]
        %v235 = vld [vmem:[#allocation6 + $0x60] sm:$0xff]
        %v236 = vld [vmem:[#allocation6 + $0x68] sm:$0xf]
        %v237 = vld [vmem:[#allocation6 + $0x6c] sm:$0xff]
        %v238 = vld [vmem:[#allocation6 + $0x74] sm:$0xf]
        %v239 = vld [vmem:[#allocation6 + $0x78] sm:$0xff]
        %v240 = vld [vmem:[#allocation6 + $0x80] sm:$0xf]
        %v241 = vld [vmem:[#allocation6 + $0x84] sm:$0xff]
        %v242 = vld [vmem:[#allocation6 + $0x8c] sm:$0xf]
        %v243 = vld [vmem:[#allocation6 + $0x90] sm:$0xff]
        %v244 = vld [vmem:[#allocation6 + $0x98] sm:$0xf]
        %v245 = vld [vmem:[#allocation6 + $0x9c] sm:$0xff]
        %v246 = vld [vmem:[#allocation6 + $0xa4] sm:$0xf]
        %v247 = vld [vmem:[#allocation6 + $0xa8] sm:$0xff]
        %v248 = vld [vmem:[#allocation6 + $0xb0] sm:$0xf]
        %v249 = vld [vmem:[#allocation6 + $0xb4] sm:$0xff]
        %v250 = vld [vmem:[#allocation6 + $0xbc] sm:$0xf]
        %v251 = vld [vmem:[#allocation6 + $0xc0] sm:$0xff]
        %v252 = vld [vmem:[#allocation6 + $0xc8] sm:$0xf]
        %v253 = vld [vmem:[#allocation6 + $0xcc] sm:$0xff]
        %v254 = vld [vmem:[#allocation6 + $0xd4] sm:$0xf]
        %v255 = vld [vmem:[#allocation6 + $0xd8] sm:$0xff]
        %v256 = vld [vmem:[#allocation6 + $0xe0] sm:$0xf]
        %v257 = vld [vmem:[#allocation6 + $0xe4] sm:$0xff]
        %v258 = vld [vmem:[#allocation6 + $0xec] sm:$0xf]
        %v259 = vld [vmem:[#allocation6 + $0xf0] sm:$0xff]
        %v260 = vld [vmem:[#allocation6 + $0xf8] sm:$0xf]
        %v261 = vld [vmem:[#allocation6 + $0xfc] sm:$0xff]
        %v262 = vld [vmem:[#allocation6 + $0x104] sm:$0xf]
        %v263 = vld [vmem:[#allocation6 + $0x108] sm:$0xff]
        %v264 = vld [vmem:[#allocation6 + $0x110] sm:$0xf]
        %v265 = vld [vmem:[#allocation6 + $0x114] sm:$0xff]
        %v266 = vld [vmem:[#allocation6 + $0x11c] sm:$0xf]
        %v267 = vld [vmem:[#allocation6 + $0x120] sm:$0xff]
        %v268 = vld [vmem:[#allocation6 + $0x128] sm:$0xf]
        %v269 = vld [vmem:[#allocation6 + $0x12c] sm:$0xff]
        %v270 = vld [vmem:[#allocation6 + $0x134] sm:$0xf]
        %v271 = vld [vmem:[#allocation6 + $0x138] sm:$0xff]
        %v272 = vld [vmem:[#allocation6 + $0x140] sm:$0xf]
        %v273 = vld [vmem:[#allocation6 + $0x144] sm:$0xff]
        %v274 = vld [vmem:[#allocation6 + $0x14c] sm:$0xf]
        %v275 = vld [vmem:[#allocation6 + $0x150] sm:$0xff]
        %v276 = vld [vmem:[#allocation6 + $0x158] sm:$0xf]
        %v277 = vld [vmem:[#allocation6 + $0x15c] sm:$0xff]
        %v278 = vld [vmem:[#allocation6 + $0x164] sm:$0xf]
        %v279 = vld [vmem:[#allocation6 + $0x168] sm:$0xff]
        %v280 = vld [vmem:[#allocation6 + $0x170] sm:$0xf]
        %v281 = vld [vmem:[#allocation6 + $0x174] sm:$0xff]
        %v282 = vld [vmem:[#allocation6 + $0x17c] sm:$0xf]
        %v283 = vld [vmem:[#allocation6 + $0x180] sm:$0xff]
        %v284 = vld [vmem:[#allocation6 + $0x188] sm:$0xf]
        %v285 = vld [vmem:[#allocation6 + $0x18c] sm:$0xff]
        %v286 = vld [vmem:[#allocation6 + $0x194] sm:$0xf]
        %v287 = vld [vmem:[#allocation6 + $0x198] sm:$0xff]
        %v288 = vld [vmem:[#allocation6 + $0x1a0] sm:$0xf]
        %v289 = vld [vmem:[#allocation6 + $0x1a4] sm:$0xff]
        %v290 = vld [vmem:[#allocation6 + $0x1ac] sm:$0xf]
        %v291 = vld [vmem:[#allocation6 + $0x1b0] sm:$0xff]
        %v292 = vld [vmem:[#allocation6 + $0x1b8] sm:$0xf]
        %v293 = vld [vmem:[#allocation6 + $0x1bc] sm:$0x33]
        %v294 = vld [vmem:[#allocation6 + $0x1c4] sm:$0x3]
        %v371 = vunpack.c.l.b16 %v219
        %v372 = vunpack.c.h.b16 %v219
        %v373 = vunpack.c.l.b16 %v220
        %v374 = vunpack.c.l.b16 %v221
        %v375 = vunpack.c.h.b16 %v221
        %v376 = vunpack.c.l.b16 %v222
        %v377 = vunpack.c.l.b16 %v223
        %v378 = vunpack.c.h.b16 %v223
        %v379 = vunpack.c.l.b16 %v224
        %v380 = vunpack.c.l.b16 %v225
        %v381 = vunpack.c.h.b16 %v225
        %v382 = vunpack.c.l.b16 %v226
        %v383 = vunpack.c.l.b16 %v227
        %v384 = vunpack.c.h.b16 %v227
        %v385 = vunpack.c.l.b16 %v228
        %v386 = vunpack.c.l.b16 %v229
        %v387 = vunpack.c.h.b16 %v229
        %v388 = vunpack.c.l.b16 %v230
        %v389 = vunpack.c.l.b16 %v231
        %v390 = vunpack.c.h.b16 %v231
        %v391 = vunpack.c.l.b16 %v232
        %v392 = vunpack.c.l.b16 %v233
        %v393 = vunpack.c.h.b16 %v233
        %v394 = vunpack.c.l.b16 %v234
        %v395 = vunpack.c.l.b16 %v235
        %v396 = vunpack.c.h.b16 %v235
        %v397 = vunpack.c.l.b16 %v236
        %v398 = vunpack.c.l.b16 %v237
        %v399 = vunpack.c.h.b16 %v237
        %v400 = vunpack.c.l.b16 %v238
        %v401 = vunpack.c.l.b16 %v239
        %v402 = vunpack.c.h.b16 %v239
        %v403 = vunpack.c.l.b16 %v240
        %v404 = vunpack.c.l.b16 %v241
        %v405 = vunpack.c.h.b16 %v241
        %v406 = vunpack.c.l.b16 %v242
        %v407 = vunpack.c.l.b16 %v243
        %v408 = vunpack.c.h.b16 %v243
        %v409 = vunpack.c.l.b16 %v244
        %v410 = vunpack.c.l.b16 %v245
        %v411 = vunpack.c.h.b16 %v245
        %v412 = vunpack.c.l.b16 %v246
        %v413 = vunpack.c.l.b16 %v247
        %v414 = vunpack.c.h.b16 %v247
        %v415 = vunpack.c.l.b16 %v248
        %v416 = vunpack.c.l.b16 %v249
        %v417 = vunpack.c.h.b16 %v249
        %v418 = vunpack.c.l.b16 %v250
        %v419 = vunpack.c.l.b16 %v251
        %v420 = vunpack.c.h.b16 %v251
        %v421 = vunpack.c.l.b16 %v252
        %v422 = vunpack.c.l.b16 %v253
        %v423 = vunpack.c.h.b16 %v253
        %v424 = vunpack.c.l.b16 %v254
        %v425 = vunpack.c.l.b16 %v255
        %v426 = vunpack.c.h.b16 %v255
        %v427 = vunpack.c.l.b16 %v256
        %v428 = vunpack.c.l.b16 %v257
        %v429 = vunpack.c.h.b16 %v257
        %v430 = vunpack.c.l.b16 %v258
        %v431 = vunpack.c.l.b16 %v259
        %v432 = vunpack.c.h.b16 %v259
        %v433 = vunpack.c.l.b16 %v260
        %v434 = vunpack.c.l.b16 %v261
        %v435 = vunpack.c.h.b16 %v261
        %v436 = vunpack.c.l.b16 %v262
        %v437 = vunpack.c.l.b16 %v263
        %v438 = vunpack.c.h.b16 %v263
        %v439 = vunpack.c.l.b16 %v264
        %v440 = vunpack.c.l.b16 %v265
        %v441 = vunpack.c.h.b16 %v265
        %v442 = vunpack.c.l.b16 %v266
        %v443 = vunpack.c.l.b16 %v267
        %v444 = vunpack.c.h.b16 %v267
        %v445 = vunpack.c.l.b16 %v268
        %v446 = vunpack.c.l.b16 %v269
        %v447 = vunpack.c.h.b16 %v269
        %v448 = vunpack.c.l.b16 %v270
        %v449 = vunpack.c.l.b16 %v271
        %v450 = vunpack.c.h.b16 %v271
        %v451 = vunpack.c.l.b16 %v272
        %v452 = vunpack.c.l.b16 %v273
        %v453 = vunpack.c.h.b16 %v273
        %v454 = vunpack.c.l.b16 %v274
        %v455 = vunpack.c.l.b16 %v275
        %v456 = vunpack.c.h.b16 %v275
        %v457 = vunpack.c.l.b16 %v276
        %v458 = vunpack.c.l.b16 %v277
        %v459 = vunpack.c.h.b16 %v277
        %v460 = vunpack.c.l.b16 %v278
        %v461 = vunpack.c.l.b16 %v279
        %v462 = vunpack.c.h.b16 %v279
        %v463 = vunpack.c.l.b16 %v280
        %v464 = vunpack.c.l.b16 %v281
        %v465 = vunpack.c.h.b16 %v281
        %v466 = vunpack.c.l.b16 %v282
        %v467 = vunpack.c.l.b16 %v283
        %v468 = vunpack.c.h.b16 %v283
        %v469 = vunpack.c.l.b16 %v284
        %v470 = vunpack.c.l.b16 %v285
        %v471 = vunpack.c.h.b16 %v285
        %v472 = vunpack.c.l.b16 %v286
        %v473 = vunpack.c.l.b16 %v287
        %v474 = vunpack.c.h.b16 %v287
        %v475 = vunpack.c.l.b16 %v288
        %v476 = vunpack.c.l.b16 %v289
        %v477 = vunpack.c.h.b16 %v289
        %v478 = vunpack.c.l.b16 %v290
        %v479 = vunpack.c.l.b16 %v291
        %v480 = vunpack.c.h.b16 %v291
        %v481 = vunpack.c.l.b16 %v292
        %v482 = vunpack.c.l.b16 %v293
        %v483 = vunpack.c.h.b16 %v293
        %v484 = vunpack.c.l.b16 %v294
        %v485 = vpack.c.b16 %v374, %v371
        %v486 = vpack.c.b16 %v375, %v372
        %v487 = vpack.c.b16 %v376, %v373
        %v488 = vpack.c.b16 %v380, %v377
        %v489 = vpack.c.b16 %v381, %v378
        %v490 = vpack.c.b16 %v382, %v379
        %v491 = vpack.c.b16 %v386, %v383
        %v492 = vpack.c.b16 %v387, %v384
        %v493 = vpack.c.b16 %v388, %v385
        %v494 = vpack.c.b16 %v392, %v389
        %v495 = vpack.c.b16 %v393, %v390
        %v496 = vpack.c.b16 %v394, %v391
        %v497 = vpack.c.b16 %v398, %v395
        %v498 = vpack.c.b16 %v399, %v396
        %v499 = vpack.c.b16 %v400, %v397
        %v500 = vpack.c.b16 %v404, %v401
        %v501 = vpack.c.b16 %v405, %v402
        %v502 = vpack.c.b16 %v406, %v403
        %v503 = vpack.c.b16 %v410, %v407
        %v504 = vpack.c.b16 %v411, %v408
        %v505 = vpack.c.b16 %v412, %v409
        %v506 = vpack.c.b16 %v416, %v413
        %v507 = vpack.c.b16 %v417, %v414
        %v508 = vpack.c.b16 %v418, %v415
        %v509 = vpack.c.b16 %v422, %v419
        %v510 = vpack.c.b16 %v423, %v420
        %v511 = vpack.c.b16 %v424, %v421
        %v512 = vpack.c.b16 %v428, %v425
        %v513 = vpack.c.b16 %v429, %v426
        %v514 = vpack.c.b16 %v430, %v427
        %v515 = vpack.c.b16 %v434, %v431
        %v516 = vpack.c.b16 %v435, %v432
        %v517 = vpack.c.b16 %v436, %v433
        %v518 = vpack.c.b16 %v440, %v437
        %v519 = vpack.c.b16 %v441, %v438
        %v520 = vpack.c.b16 %v442, %v439
        %v521 = vpack.c.b16 %v446, %v443
        %v522 = vpack.c.b16 %v447, %v444
        %v523 = vpack.c.b16 %v448, %v445
        %v524 = vpack.c.b16 %v452, %v449
        %v525 = vpack.c.b16 %v453, %v450
        %v526 = vpack.c.b16 %v454, %v451
        %v527 = vpack.c.b16 %v458, %v455
        %v528 = vpack.c.b16 %v459, %v456
        %v529 = vpack.c.b16 %v460, %v457
        %v530 = vpack.c.b16 %v464, %v461
        %v531 = vpack.c.b16 %v465, %v462
        %v532 = vpack.c.b16 %v466, %v463
        %v533 = vpack.c.b16 %v470, %v467
        %v534 = vpack.c.b16 %v471, %v468
        %v535 = vpack.c.b16 %v472, %v469
        %v536 = vpack.c.b16 %v476, %v473
        %v537 = vpack.c.b16 %v477, %v474
        %v538 = vpack.c.b16 %v478, %v475
        %v539 = vpack.c.b16 %v482, %v479
        %v540 = vpack.c.b16 %v483, %v480
        %v541 = vpack.c.b16 %v484, %v481
        %vm596 = vcmask 359424
        %v598 = vsel %vm596, %v218, 0
        %vm600 = vcmask 1045504
        %v602 = vsel %vm600, %v539, 0
        %v605 = vsel %vm600, %v540, 0
        %v608 = vsel %vm600, %v541, 0
        %610 = vmatprep.subr.bf16.mxu0 %v486
        %611 = vmatpush1.bf16.msra.mxu0 %v485
        %612 = vmatprep.subr.bf16.mxu0 %v489
        %613 = vmatpush1.bf16.msra.mxu0 %v488
        %614 = vmatprep.subr.bf16.mxu0 %v492
        %615 = vmatpush1.bf16.msra.mxu0 %v491
        %616 = vmatprep.subr.bf16.mxu0 %v495
        %617 = vmatpush1.bf16.msra.mxu0 %v494
        %618 = vmatprep.subr.bf16.mxu0 %v498
        %619 = vmatpush1.bf16.msra.mxu0 %v497
        %620 = vmatprep.subr.bf16.mxu0 %v501
        %621 = vmatpush1.bf16.msra.mxu0 %v500
        %622 = vmatprep.subr.bf16.mxu0 %v504
        %623 = vmatpush1.bf16.msra.mxu0 %v503
        %624 = vmatprep.subr.bf16.mxu0 %v507
        %625 = vmatpush1.bf16.msra.mxu0 %v506
        %626 = vmatprep.subr.bf16.mxu0 %v510
        %627 = vmatpush1.bf16.msra.mxu0 %v509
        %628 = vmatprep.subr.bf16.mxu0 %v513
        %629 = vmatpush1.bf16.msra.mxu0 %v512
        %630 = vmatprep.subr.bf16.mxu0 %v516
        %631 = vmatpush1.bf16.msra.mxu0 %v515
        %632 = vmatprep.subr.bf16.mxu0 %v519
        %633 = vmatpush1.bf16.msra.mxu0 %v518
        %634 = vmatprep.subr.bf16.mxu0 %v522
        %635 = vmatpush1.bf16.msra.mxu0 %v521
        %636 = vmatprep.subr.bf16.mxu0 %v525
        %637 = vmatpush1.bf16.msra.mxu0 %v524
        %638 = vmatprep.subr.bf16.mxu0 %v528
        %639 = vmatpush1.bf16.msra.mxu0 %v527
        %640 = vmatprep.subr.bf16.mxu0 %v531
        %641 = vmatpush1.bf16.msra.mxu0 %v530
        %642 = vmatprep.mubr.bf16.mxu0 %v217
        %643 = vmatmul.mubr.bf16.gmra.mrb[0].mxu0 %v216
        %v644 = vpop.f32.mrb[0].mxu0
        %v645 = vadd.f32 0.0, %v644
        %v646 = vpop.f32.mrb[0].mxu0
        %v647 = vadd.f32 0.0, %v646
        %v648 = vpop.f32.mrb[0].mxu0
        %v649 = vadd.f32 0.0, %v648
        %v650 = vpop.f32.mrb[0].mxu0
        %v651 = vadd.f32 0.0, %v650
        %652 = vdwg.mxu0
        %653 = vmatprep.subr.bf16.mxu0 %v534
        %654 = vmatpush1.bf16.msra.mxu0 %v533
        %655 = vmatprep.subr.bf16.mxu0 %v537
        %656 = vmatpush1.bf16.msra.mxu0 %v536
        %657 = vmatprep.subr.bf16.mxu0 %v605
        %658 = vmatpush1.bf16.msra.mxu0 %v602
        %659 = vmatprep.subr.bf16.mxu0 0
        %660 = vmatpush1.bf16.msra.mxu0 0
        %661 = vmatprep.subr.bf16.mxu0 0
        %662 = vmatpush1.bf16.msra.mxu0 0
        %663 = vmatprep.subr.bf16.mxu0 0
        %664 = vmatpush1.bf16.msra.mxu0 0
        %665 = vmatprep.subr.bf16.mxu0 0
        %666 = vmatpush1.bf16.msra.mxu0 0
        %667 = vmatprep.subr.bf16.mxu0 0
        %668 = vmatpush1.bf16.msra.mxu0 0
        %669 = vmatprep.subr.bf16.mxu0 0
        %670 = vmatpush1.bf16.msra.mxu0 0
        %671 = vmatprep.subr.bf16.mxu0 0
        %672 = vmatpush1.bf16.msra.mxu0 0
        %673 = vmatprep.subr.bf16.mxu0 0
        %674 = vmatpush1.bf16.msra.mxu0 0
        %675 = vmatprep.subr.bf16.mxu0 0
        %676 = vmatpush1.bf16.msra.mxu0 0
        %677 = vmatprep.subr.bf16.mxu0 0
        %678 = vmatpush1.bf16.msra.mxu0 0
        %679 = vmatprep.subr.bf16.mxu0 0
        %680 = vmatpush1.bf16.msra.mxu0 0
        %681 = vmatprep.subr.bf16.mxu0 0
        %682 = vmatpush1.bf16.msra.mxu0 0
        %683 = vmatprep.subr.bf16.mxu0 0
        %684 = vmatpush1.bf16.msra.mxu0 0
        %685 = vmatprep.mubr.bf16.mxu0 0
        %686 = vmatmul.mubr.bf16.gmra.mrb[0].mxu0 %v598
        %v687 = vpop.f32.mrb[0].mxu0
        %v688 = vadd.f32 %v645, %v687
        %v689 = vpop.f32.mrb[0].mxu0
        %v690 = vadd.f32 %v647, %v689
        %v691 = vpop.f32.mrb[0].mxu0
        %v692 = vadd.f32 %v649, %v691
        %v693 = vpop.f32.mrb[0].mxu0
        %v694 = vadd.f32 %v651, %v693
        %695 = vdwg.mxu0
        %696 = vmatprep.subr.bf16.mxu0 0
        %697 = vmatpush1.bf16.msra.mxu0 %v487
        %698 = vmatprep.subr.bf16.mxu0 0
        %699 = vmatpush1.bf16.msra.mxu0 %v490
        %700 = vmatprep.subr.bf16.mxu0 0
        %701 = vmatpush1.bf16.msra.mxu0 %v493
        %702 = vmatprep.subr.bf16.mxu0 0
        %703 = vmatpush1.bf16.msra.mxu0 %v496
        %704 = vmatprep.subr.bf16.mxu0 0
        %705 = vmatpush1.bf16.msra.mxu0 %v499
        %706 = vmatprep.subr.bf16.mxu0 0
        %707 = vmatpush1.bf16.msra.mxu0 %v502
        %708 = vmatprep.subr.bf16.mxu0 0
        %709 = vmatpush1.bf16.msra.mxu0 %v505
        %710 = vmatprep.subr.bf16.mxu0 0
        %711 = vmatpush1.bf16.msra.mxu0 %v508
        %712 = vmatprep.subr.bf16.mxu0 0
        %713 = vmatpush1.bf16.msra.mxu0 %v511
        %714 = vmatprep.subr.bf16.mxu0 0
        %715 = vmatpush1.bf16.msra.mxu0 %v514
        %716 = vmatprep.subr.bf16.mxu0 0
        %717 = vmatpush1.bf16.msra.mxu0 %v517
        %718 = vmatprep.subr.bf16.mxu0 0
        %719 = vmatpush1.bf16.msra.mxu0 %v520
        %720 = vmatprep.subr.bf16.mxu0 0
        %721 = vmatpush1.bf16.msra.mxu0 %v523
        %722 = vmatprep.subr.bf16.mxu0 0
        %723 = vmatpush1.bf16.msra.mxu0 %v526
        %724 = vmatprep.subr.bf16.mxu0 0
        %725 = vmatpush1.bf16.msra.mxu0 %v529
        %726 = vmatprep.subr.bf16.mxu0 0
        %727 = vmatpush1.bf16.msra.mxu0 %v532
        %728 = vmatprep.mubr.bf16.mxu0 %v217
        %729 = vmatmul.mubr.bf16.gmra.mrb[0].mxu0 %v216
        %v730 = vpop.f32.mrb[0].mxu0
        %v731 = vadd.f32 0.0, %v730
        %v732 = vpop.f32.mrb[0].mxu0
        %v733 = vpop.f32.mrb[0].mxu0
        %v734 = vadd.f32 0.0, %v733
        %v735 = vpop.f32.mrb[0].mxu0
        %736 = vdwg.mxu0
        %737 = vmatprep.subr.bf16.mxu0 0
        %738 = vmatpush1.bf16.msra.mxu0 %v535
        %739 = vmatprep.subr.bf16.mxu0 0
        %740 = vmatpush1.bf16.msra.mxu0 %v538
        %741 = vmatprep.subr.bf16.mxu0 0
        %742 = vmatpush1.bf16.msra.mxu0 %v608
        %743 = vmatprep.subr.bf16.mxu0 0
        %744 = vmatpush1.bf16.msra.mxu0 0
        %745 = vmatprep.subr.bf16.mxu0 0
        %746 = vmatpush1.bf16.msra.mxu0 0
        %747 = vmatprep.subr.bf16.mxu0 0
        %748 = vmatpush1.bf16.msra.mxu0 0
        %749 = vmatprep.subr.bf16.mxu0 0
        %750 = vmatpush1.bf16.msra.mxu0 0
        %751 = vmatprep.subr.bf16.mxu0 0
        %752 = vmatpush1.bf16.msra.mxu0 0
        %753 = vmatprep.subr.bf16.mxu0 0
        %754 = vmatpush1.bf16.msra.mxu0 0
        %755 = vmatprep.subr.bf16.mxu0 0
        %756 = vmatpush1.bf16.msra.mxu0 0
        %757 = vmatprep.subr.bf16.mxu0 0
        %758 = vmatpush1.bf16.msra.mxu0 0
        %759 = vmatprep.subr.bf16.mxu0 0
        %760 = vmatpush1.bf16.msra.mxu0 0
        %761 = vmatprep.subr.bf16.mxu0 0
        %762 = vmatpush1.bf16.msra.mxu0 0
        %763 = vmatprep.subr.bf16.mxu0 0
        %764 = vmatpush1.bf16.msra.mxu0 0
        %765 = vmatprep.subr.bf16.mxu0 0
        %766 = vmatpush1.bf16.msra.mxu0 0
        %767 = vmatprep.subr.bf16.mxu0 0
        %768 = vmatpush1.bf16.msra.mxu0 0
        %769 = vmatprep.mubr.bf16.mxu0 0
        %770 = vmatmul.mubr.bf16.gmra.mrb[0].mxu0 %v598
        %v771 = vpop.f32.mrb[0].mxu0
        %v772 = vadd.f32 %v731, %v771
        %v773 = vpop.f32.mrb[0].mxu0
        %v774 = vpop.f32.mrb[0].mxu0
        %v775 = vadd.f32 %v734, %v774
        %v776 = vpop.f32.mrb[0].mxu0
        %777 = vdwg.mxu0
        %v778 = vrot.slane %v690, 1
        %v779 = vrot.slane %v694, 1
        %v780 = vlaneseq
        %v781 = vshrl.u32 %v780, 7
        %vm782 = vcmp.lt.s32.totalorder %v781, 7
        %v783 = vsel %vm782, %v778, %v779
        %v784 = vsel %vm782, %v779, %v778
        %v785 = vadd.f32 %v688, %v783
        %v786 = vadd.f32 %v692, %v784
        %v787 = vrot.slane %v772, 2
        %v788 = vrot.slane %v775, 2
        %vm789 = vcmp.lt.s32.totalorder %v781, 6
        %v790 = vsel %vm789, %v787, %v788
        %v791 = vsel %vm789, %v788, %v787
        %v792 = vadd.f32 %v785, %v790
        %v793 = vadd.f32 %v786, %v791
        %v794 = vld [vmem:[%s2] sm:$0x1]
        %v796 = vlaneseq
        %v797 = vshrl.u32 %v796, 7
        %v798 = vsub.s32 0, %v797
        %v799 = vrot.slane %v794, %v798
        %v801 = vadd.f32 %v792, %v799
        %v802 = vadd.f32 %v793, %v799
        %v803 = vmax.f32 %v801, 0.0
        %v804 = vmax.f32 %v802, 0.0
        %v805 = vrot.slane %v803, 1
        %v806 = vrot.slane %v804, 1
        %v807 = vsel %vm782, %v805, %v806
        %v808 = vsel %vm782, %v806, %v805
        %v809 = vmax.f32 %v803, %v807
        %v810 = vmax.f32 %v804, %v808
        %v811 = vadd.s32 %v781, 8
        %vm812 = vcmp.lt.s32.totalorder %v781, 0
        %v813 = vsub.s32 0, %v781
        %v814 = vsel %vm812, %v813, %v781
        %v815 = vshrl.u32 %v814, 1
        %v816 = vand.u32 %v814, 1
        %v817 = vsub.s32 0, %v816
        %v818 = vsel %vm812, %v817, %v816
        %vm819 = vcmp.lt.s32.totalorder %v811, 0
        %v820 = vsub.s32 0, %v811
        %v821 = vsel %vm819, %v820, %v811
        %v822 = vshrl.u32 %v821, 1
        %v823 = vand.u32 %v821, 1
        %v824 = vsub.s32 0, %v823
        %v825 = vsel %vm819, %v824, %v823
        %vm826 = vcmp.ne.s32.totalorder %v818, 0
        %vm827 = vcmp.ne.s32.totalorder %v825, 0
        %vm828 = vcmp.lt.s32.totalorder %v818, 0
        %vm829 = vcmp.lt.s32.totalorder %v825, 0
        %vm830 = vmand %vm828, %vm826
        %vm831 = vmand %vm829, %vm827
        %v832 = vadd.s32 %v818, 2
        %v833 = vadd.s32 %v825, 2
        %v834 = vsel %vm830, %v832, %v818
        %v835 = vsel %vm831, %v833, %v825
        %vm836 = vcmp.eq.s32.totalorder %v834, 0
        %vm837 = vcmp.eq.s32.totalorder %v835, 0
        %vm838 = vcmp.le.s32.totalorder %v781, 4
        %vm839 = vcmp.le.s32.totalorder %v811, 4
        %vm840 = vmand %vm836, %vm838
        %vm841 = vmand %vm837, %vm839
        %v842 = vsel %vm840, 1, 0
        %v843 = vsel %vm841, 1, 0
        %vm844 = vcmp.eq.s32.totalorder %v842, 1
        %vm845 = vcmp.eq.s32.totalorder %v843, 1
        %v846 = vsel %vm844, %v809, 0.0
        %v847 = vsel %vm845, %v810, 0.0
        %v848 = vadd.f32 %v846, %v847
        %v849 = vrot.slane %v848, 4
        %v850 = vadd.f32 %v848, %v849
        %v851 = vrot.slane %v850, 2
        %v852 = vadd.f32 %v850, %v851
        %v853 = vrot.slane %v852, 1
        %v854 = vadd.f32 %v852, %v853
        %v855 = vmul.f32 %v854, 0.33333334
        %856 = vst [vmem:[%s200] sm:$0x1] %v855
        %s857 = sand.u32 %s97, 1
        %s858 = scalar_lea.sflag [#allocation5], %s857
        %s859 = sand.u32 %s97, 1
        %s860 = scalar_lea.vmem [#allocation8], %s859
        // Predicated region
        $region41: #{tpu_custom_call.1} parent=31 // pred_check
          %p861 = pneg %p107
        $region42: #{tpu_custom_call.1} parent=31 // pred_check_branch
          %863 = sbr.rel (%p861) target = $region44
        $region43: #{tpu_custom_call.1} parent=31 // pred_region
          %s865 = ssub.s32 16, 16
          %866 = vsyncadd %s858, %s865
          %s867 = smul.addr %s21, 16
          %s868 = scalar_lea.hbm %s3, %s867
          %s870 = sshll.u32 %s860, 4
          %s871 = int_to_ptr.vmem [resolvable:$true] %s870
          %873 = dma.vmem_to_hbm [thread:$0]  %s871, 16, %s868, %s858
        $region44: #{tpu_custom_call.1} parent=31 // pred_fallthru
          _
      $region32: #{tpu_custom_call.1} parent=5 // pred_fallthru
        _
      %p874 = scmp.le.s32.totalorder 2, %s16
      // Predicated region
      $region45: #{tpu_custom_call.1} parent=5 // pred_check
        %p875 = pneg %p874
      $region46: #{tpu_custom_call.1} parent=5 // pred_check_branch
        %877 = sbr.rel (%p875) target = $region48
      $region47: #{tpu_custom_call.1} parent=5 // pred_region
        %s878 = ssub.s32 %s16, 2
        // Predicated region
        $region49: #{tpu_custom_call.1} parent=47 // pred_check
          %p879 = pneg %p113
        $region50: #{tpu_custom_call.1} parent=47 // pred_check_branch
          %881 = sbr.rel (%p879) target = $region52
        $region51: #{tpu_custom_call.1} parent=47 // pred_region
          %s882 = sand.u32 %s98, 1
          %s883 = scalar_lea.sflag [#allocation5], %s882
          %s884 = sand.u32 %s98, 1
          %s885 = scalar_lea.vmem [#allocation8], %s884
          %886 = dma.done %s883, 16
        $region52: #{tpu_custom_call.1} parent=47 // pred_fallthru
          _
      $region48: #{tpu_custom_call.1} parent=5 // pred_fallthru
        _
    $region6: #{tpu_custom_call.1} parent=1 // loop_footer
      %s20 = sadd.s32 1, %s16
    $region7: #{tpu_custom_call.1} parent=1 // loop_footer_branch
      %15 = sbr.rel target = $region3
    $region8: #{tpu_custom_call.1} parent=1 // loop_exit
      _
    %887 = vsyncpa [#allocation4], 1
    %s888 = scalar_lea.sflag [#allocation4], 1
    %889 = vsyncpa %s888, 1
    %890 = vsyncpa [#allocation7], 1
    %891 = vsyncpa [#allocation5], 1
    %s892 = scalar_lea.sflag [#allocation5], 1
    %893 = vsyncpa %s892, 1

</llo_original>
